<compile_context>
chip_gen: v6e
topology: v6e:2x2x1
jax: 0.10.0
libtpu: 0.0.40
codegen_flags: <defaults>
</compile_context>

<pallas_src>
import functools

import jax
import jax.numpy as jnp
from jax.experimental import pallas as pl
from jax.experimental.pallas import tpu as pltpu


def _round_up(x, m):
    return ((x + m - 1) // m) * m


def mlp_kernel(x_ref, w1_ref, b1_ref, w2_ref, b2_ref, w3_ref, b3_ref, o_ref):
    # Fused f32 -> bf16 cast of the streaming x tile (free VPU work in this
    # memory-bound regime; avoids a separate wrapper-side cast pass over x).
    x = x_ref[...].astype(jnp.bfloat16)
    # fc1 + relu1: bf16 x bf16 -> f32 accumulate on the MXU.
    h1 = jnp.dot(x, w1_ref[...], preferred_element_type=jnp.float32)
    h1 = jnp.maximum(h1 + b1_ref[...], 0.0)
    # fc2 + relu2 (activation back to bf16 for the MXU, accumulate f32).
    h2 = jnp.dot(h1.astype(jnp.bfloat16), w2_ref[...],
                 preferred_element_type=jnp.float32)
    h2 = jnp.maximum(h2 + b2_ref[...], 0.0)
    # fc (logits, no activation).  Output tile is lane-dense (padded to 128)
    # and stored in bf16 to halve output HBM traffic.
    out = jnp.dot(h2.astype(jnp.bfloat16), w3_ref[...],
                  preferred_element_type=jnp.float32)
    o_ref[...] = (out + b3_ref[...]).astype(o_ref.dtype)


def prepare_params(params):
    """One-time (outside the jitted forward) padding + bf16 cast of the weights.

    Returns (w1, b1, w2, b2, w3, b3) with:
      * weights in bf16, stored (in_features, out_features),
      * hidden-2 (64) and logits (10) zero-padded to 128 so every matmul output
        / the final store is lane-dense (exact: zero cols/rows, ReLU(0)=0),
      * biases in f32 (added to the f32 accumulator), padded with zeros.
    """
    w1, b1, w2, b2, w3, b3 = params
    H1 = w1.shape[1]                         # 128 (already lane-dense)
    H2 = _round_up(w2.shape[1], 128)         # 64  -> 128
    NC = _round_up(w3.shape[1], 128)         # 10  -> 128

    w2p = jnp.zeros((H1, H2), jnp.float32).at[:, : w2.shape[1]].set(w2)
    b2p = jnp.zeros((1, H2), jnp.float32).at[:, : w2.shape[1]].set(b2)
    w3p = jnp.zeros((H2, NC), jnp.float32).at[: w3.shape[0], : w3.shape[1]].set(w3)
    b3p = jnp.zeros((1, NC), jnp.float32).at[:, : w3.shape[1]].set(b3)

    return (w1.astype(jnp.bfloat16), b1.astype(jnp.float32),
            w2p.astype(jnp.bfloat16), b2p,
            w3p.astype(jnp.bfloat16), b3p)


@functools.partial(jax.jit, static_argnames=("num_classes", "tile_b"))
def ann2h1d_forward(x, prepared, *, num_classes=10, tile_b=1024):
    """x: [B, 1, 28, 28] float32 (NCHW). Returns logits [B, num_classes] f32.

    `prepared` must come from prepare_params(params).
    """
    w1, b1, w2, b2, w3, b3 = prepared
    B = x.shape[0]
    in_dim = w1.shape[0]          # 784
    H1 = w1.shape[1]              # 128
    H2 = w2.shape[1]              # 128 (padded)
    NC = w3.shape[1]              # 128 (padded)

    # Streamed in f32; the bf16 cast happens inside the kernel.
    x_flat = x.reshape(B, -1).astype(jnp.float32)

    # Tile: multiple of 16 (bf16 output sublane packing), capped at tile_b,
    # never larger than needed for small batches.  No batch padding/copy:
    # Pallas masks the ragged final block.
    tb = _round_up(min(tile_b, _round_up(B, 16)), 16)
    grid = (pl.cdiv(B, tb),)

    const = lambda i: (0, 0)   # weights/biases stay resident across grid steps
    out = pl.pallas_call(
        mlp_kernel,
        out_shape=jax.ShapeDtypeStruct((B, NC), jnp.bfloat16),
        grid=grid,
        in_specs=[
            pl.BlockSpec((tb, in_dim), lambda i: (i, 0)),   # streaming x tile
            pl.BlockSpec((in_dim, H1), const),
            pl.BlockSpec((1, H1), const),
            pl.BlockSpec((H1, H2), const),
            pl.BlockSpec((1, H2), const),
            pl.BlockSpec((H2, NC), const),
            pl.BlockSpec((1, NC), const),
        ],
        out_specs=pl.BlockSpec((tb, NC), lambda i: (i, 0)),
        compiler_params=pltpu.CompilerParams(
            dimension_semantics=("parallel",),
        ),
    )(x_flat, w1, b1, w2, b2, w3, b3)

    # Single tiny slice + cast of the lane-dense bf16 output.
    return out[:, :num_classes].astype(jnp.float32)


def init_params(key, num_classes=10):
    """PyTorch-Linear-style uniform(-1/sqrt(fan_in), 1/sqrt(fan_in)) init.

    Weights stored (in_features, out_features): x @ W + b == PyTorch x @ W.T + b.
    """
    def linear(key, fan_in, fan_out):
        kw, kb = jax.random.split(key)
        bound = 1.0 / jnp.sqrt(fan_in)
        w = jax.random.uniform(kw, (fan_in, fan_out), jnp.float32, -bound, bound)
        b = jax.random.uniform(kb, (1, fan_out), jnp.float32, -bound, bound)
        return w, b

    k1, k2, k3 = jax.random.split(key, 3)
    w1, b1 = linear(k1, 784, 128)
    w2, b2 = linear(k2, 128, 64)
    w3, b3 = linear(k3, 64, num_classes)
    return (w1, b1, w2, b2, w3, b3)


def _reference_forward(x, params):
    """Pure-JAX reference mimicking the kernel's bf16-input / f32-accumulate math.

    Note: logits deviate from a pure-f32 PyTorch ANN2H1D at the ~1e-2 level
    because inputs/weights are bf16 on the MXU (documented tolerance).
    """
    w1, b1, w2, b2, w3, b3 = params
    xf = x.reshape(x.shape[0], -1).astype(jnp.float32)
    h1 = jnp.dot(xf.astype(jnp.bfloat16), w1.astype(jnp.bfloat16),
                 preferred_element_type=jnp.float32)
    h1 = jnp.maximum(h1 + b1, 0.0)
    h2 = jnp.dot(h1.astype(jnp.bfloat16), w2.astype(jnp.bfloat16),
                 preferred_element_type=jnp.float32)
    h2 = jnp.maximum(h2 + b2, 0.0)
    out = jnp.dot(h2.astype(jnp.bfloat16), w3.astype(jnp.bfloat16),
                  preferred_element_type=jnp.float32)
    return out + b3


if __name__ == "__main__":
    key = jax.random.PRNGKey(0)
    kx, kp, kx2 = jax.random.split(key, 3)

    num_classes = 10
    params = init_params(kp, num_classes=num_classes)
    prepared = prepare_params(params)

    # Small case (batch=2, MNIST-shaped NCHW input).
    B = 2
    x = jax.random.normal(kx, (B, 1, 28, 28), jnp.float32)
    out = ann2h1d_forward(x, prepared, num_classes=num_classes)
    jax.block_until_ready(out)
    ref = _reference_forward(x, params)
    assert out.shape == (B, num_classes)
    assert jnp.allclose(out, ref, atol=2e-2, rtol=2e-2), (
        f"max abs diff {jnp.max(jnp.abs(out - ref))}")

    # Ragged multi-tile case: exercises >1 grid step and the masked final block
    # (no jnp.pad of x anywhere).
    B2 = 300
    x2 = jax.random.normal(kx2, (B2, 1, 28, 28), jnp.float32)
    out2 = ann2h1d_forward(x2, prepared, num_classes=num_classes, tile_b=128)
    jax.block_until_ready(out2)
    ref2 = _reference_forward(x2, params)
    assert out2.shape == (B2, num_classes)
    assert jnp.allclose(out2, ref2, atol=2e-2, rtol=2e-2), (
        f"max abs diff {jnp.max(jnp.abs(out2 - ref2))}")

    print("KERNEL_OK")
</pallas_src>

<mosaic_0001>
module attributes {stable_mosaic.version = 11 : i64} {
  func.func @mlp_kernel(%arg0: i32, %arg1: memref<16x784xf32, #tpu.memory_space<vmem>>, %arg2: memref<784x128xbf16, #tpu.memory_space<vmem>>, %arg3: memref<1x128xf32, #tpu.memory_space<vmem>>, %arg4: memref<128x128xbf16, #tpu.memory_space<vmem>>, %arg5: memref<1x128xf32, #tpu.memory_space<vmem>>, %arg6: memref<128x128xbf16, #tpu.memory_space<vmem>>, %arg7: memref<1x128xf32, #tpu.memory_space<vmem>>, %arg8: memref<16x128xbf16, #tpu.memory_space<vmem>>) attributes {dimension_semantics = [#tpu.dimension_semantics<parallel>], iteration_bounds = array<i64: 1>, scalar_prefetch = 0 : i64, scratch_operands = 0 : i64, tpu.core_type = #tpu.core_type<tc>, window_params = [{transform_indices = @transform_0, window_bounds = array<i64: 16, 784>}, {pipeline_mode = #tpu.pipeline_mode<synchronous>, transform_indices = @transform_1, window_bounds = array<i64: 784, 128>}, {pipeline_mode = #tpu.pipeline_mode<synchronous>, transform_indices = @transform_2, window_bounds = array<i64: 1, 128>}, {pipeline_mode = #tpu.pipeline_mode<synchronous>, transform_indices = @transform_3, window_bounds = array<i64: 128, 128>}, {pipeline_mode = #tpu.pipeline_mode<synchronous>, transform_indices = @transform_4, window_bounds = array<i64: 1, 128>}, {pipeline_mode = #tpu.pipeline_mode<synchronous>, transform_indices = @transform_5, window_bounds = array<i64: 128, 128>}, {pipeline_mode = #tpu.pipeline_mode<synchronous>, transform_indices = @transform_6, window_bounds = array<i64: 1, 128>}, {transform_indices = @transform_7, window_bounds = array<i64: 16, 128>}]} {
    %c0 = arith.constant 0 : index
    %c0_0 = arith.constant 0 : index
    %0 = vector.load %arg1[%c0, %c0_0] : memref<16x784xf32, #tpu.memory_space<vmem>>, vector<16x784xf32>
    %1 = arith.truncf %0 : vector<16x784xf32> to vector<16x784xbf16>
    %c0_1 = arith.constant 0 : index
    %c0_2 = arith.constant 0 : index
    %2 = vector.load %arg2[%c0_1, %c0_2] : memref<784x128xbf16, #tpu.memory_space<vmem>>, vector<784x128xbf16>
    %cst = arith.constant dense<0.000000e+00> : vector<16x128xf32>
    %3 = tpu.matmul %1, %2, %cst {dimension_numbers = #tpu.dot_dimension_numbers<[1], [0], [0], [1], [0, 0, 1, 1], [], []>} : vector<16x784xbf16>, vector<784x128xbf16>, vector<16x128xf32> -> vector<16x128xf32>
    %c0_3 = arith.constant 0 : index
    %c0_4 = arith.constant 0 : index
    %4 = vector.load %arg3[%c0_3, %c0_4] : memref<1x128xf32, #tpu.memory_space<vmem>>, vector<1x128xf32>
    %5 = vector.broadcast %4 : vector<1x128xf32> to vector<16x128xf32>
    %6 = arith.addf %3, %5 : vector<16x128xf32>
    %cst_5 = arith.constant 0.000000e+00 : f32
    %7 = vector.broadcast %cst_5 : f32 to vector<16x128xf32>
    %8 = arith.maximumf %6, %7 : vector<16x128xf32>
    %9 = arith.truncf %8 : vector<16x128xf32> to vector<16x128xbf16>
    %c0_6 = arith.constant 0 : index
    %c0_7 = arith.constant 0 : index
    %10 = vector.load %arg4[%c0_6, %c0_7] : memref<128x128xbf16, #tpu.memory_space<vmem>>, vector<128x128xbf16>
    %cst_8 = arith.constant dense<0.000000e+00> : vector<16x128xf32>
    %11 = tpu.matmul %9, %10, %cst_8 {dimension_numbers = #tpu.dot_dimension_numbers<[1], [0], [0], [1], [0, 0, 1, 1], [], []>} : vector<16x128xbf16>, vector<128x128xbf16>, vector<16x128xf32> -> vector<16x128xf32>
    %c0_9 = arith.constant 0 : index
    %c0_10 = arith.constant 0 : index
    %12 = vector.load %arg5[%c0_9, %c0_10] : memref<1x128xf32, #tpu.memory_space<vmem>>, vector<1x128xf32>
    %13 = vector.broadcast %12 : vector<1x128xf32> to vector<16x128xf32>
    %14 = arith.addf %11, %13 : vector<16x128xf32>
    %cst_11 = arith.constant 0.000000e+00 : f32
    %15 = vector.broadcast %cst_11 : f32 to vector<16x128xf32>
    %16 = arith.maximumf %14, %15 : vector<16x128xf32>
    %17 = arith.truncf %16 : vector<16x128xf32> to vector<16x128xbf16>
    %c0_12 = arith.constant 0 : index
    %c0_13 = arith.constant 0 : index
    %18 = vector.load %arg6[%c0_12, %c0_13] : memref<128x128xbf16, #tpu.memory_space<vmem>>, vector<128x128xbf16>
    %cst_14 = arith.constant dense<0.000000e+00> : vector<16x128xf32>
    %19 = tpu.matmul %17, %18, %cst_14 {dimension_numbers = #tpu.dot_dimension_numbers<[1], [0], [0], [1], [0, 0, 1, 1], [], []>} : vector<16x128xbf16>, vector<128x128xbf16>, vector<16x128xf32> -> vector<16x128xf32>
    %c0_15 = arith.constant 0 : index
    %c0_16 = arith.constant 0 : index
    %20 = vector.load %arg7[%c0_15, %c0_16] : memref<1x128xf32, #tpu.memory_space<vmem>>, vector<1x128xf32>
    %21 = vector.broadcast %20 : vector<1x128xf32> to vector<16x128xf32>
    %22 = arith.addf %19, %21 : vector<16x128xf32>
    %23 = arith.truncf %22 : vector<16x128xf32> to vector<16x128xbf16>
    %c0_17 = arith.constant 0 : index
    %c0_18 = arith.constant 0 : index
    %24 = vector.load %arg8[%c0_17, %c0_18] : memref<16x128xbf16, #tpu.memory_space<vmem>>, vector<16x128xbf16>
    tpu.vector_store %arg8[%c0_17, %c0_18], %23 {strides = array<i32>} : memref<16x128xbf16, #tpu.memory_space<vmem>>, vector<16x128xbf16>,
    return
  }
  func.func @transform_0(%arg0: i32) -> (i32, i32) {
    %c0_i32 = arith.constant 0 : i32
    %c0_i32_0 = arith.constant 0 : i32
    return %arg0, %c0_i32 : i32, i32
  }
  func.func @transform_1(%arg0: i32) -> (i32, i32) {
    %c0_i32 = arith.constant 0 : i32
    %c0_i32_0 = arith.constant 0 : i32
    %c0_i32_1 = arith.constant 0 : i32
    return %c0_i32, %c0_i32_0 : i32, i32
  }
  func.func @transform_2(%arg0: i32) -> (i32, i32) {
    %c0_i32 = arith.constant 0 : i32
    %c0_i32_0 = arith.constant 0 : i32
    %c0_i32_1 = arith.constant 0 : i32
    return %c0_i32, %c0_i32_0 : i32, i32
  }
  func.func @transform_3(%arg0: i32) -> (i32, i32) {
    %c0_i32 = arith.constant 0 : i32
    %c0_i32_0 = arith.constant 0 : i32
    %c0_i32_1 = arith.constant 0 : i32
    return %c0_i32, %c0_i32_0 : i32, i32
  }
  func.func @transform_4(%arg0: i32) -> (i32, i32) {
    %c0_i32 = arith.constant 0 : i32
    %c0_i32_0 = arith.constant 0 : i32
    %c0_i32_1 = arith.constant 0 : i32
    return %c0_i32, %c0_i32_0 : i32, i32
  }
  func.func @transform_5(%arg0: i32) -> (i32, i32) {
    %c0_i32 = arith.constant 0 : i32
    %c0_i32_0 = arith.constant 0 : i32
    %c0_i32_1 = arith.constant 0 : i32
    return %c0_i32, %c0_i32_0 : i32, i32
  }
  func.func @transform_6(%arg0: i32) -> (i32, i32) {
    %c0_i32 = arith.constant 0 : i32
    %c0_i32_0 = arith.constant 0 : i32
    %c0_i32_1 = arith.constant 0 : i32
    return %c0_i32, %c0_i32_0 : i32, i32
  }
  func.func @transform_7(%arg0: i32) -> (i32, i32) {
    %c0_i32 = arith.constant 0 : i32
    %c0_i32_0 = arith.constant 0 : i32
    return %arg0, %c0_i32 : i32, i32
  }
}

</mosaic_0001>

<llo_original>
// kernel: ann2h1d_forward.1
$region0: #{ann2h1d_forward.1}
  #allocation0 [shape = 'u32[]', space=smem, size = 0x4, offset = 0x4, fixed_abs, tag = 'smem constant byte address 0x4 - core index']
  #allocation1 [shape = 'u32[144,128]{1,0:T(1,128)}', space=vmem, size = 0x12000, scoped, tag = 'internal scratch']
  %s0 = inlined_call_operand.vmem [shape: f32[2,784], index: 0, kind: input, shape index: {}]
  %s1 = inlined_call_operand.hbm [shape: bf16[784,128], index: 1, kind: input, shape index: {}]
  %s2 = inlined_call_operand.vmem [shape: f32[1,128], index: 2, kind: input, shape index: {}]
  %s3 = inlined_call_operand.vmem [shape: bf16[128,128], index: 3, kind: input, shape index: {}]
  %s4 = inlined_call_operand.vmem [shape: f32[1,128], index: 4, kind: input, shape index: {}]
  %s5 = inlined_call_operand.vmem [shape: bf16[128,128], index: 5, kind: input, shape index: {}]
  %s6 = inlined_call_operand.vmem [shape: f32[1,128], index: 6, kind: input, shape index: {}]
  %s7 = inlined_call_operand.vmem [shape: bf16[2,128], index: 7, kind: output, shape index: {}]
  %s8 = sld [smem:[#allocation0]]
  $region72: #{ann2h1d_forward.1} parent=0
    _
  %s10 = ssub.s32 1, %s8
  %s11 = scalar_select 0, %s10, %s8
  $region1: #{ann2h1d_forward.1} parent=0
    #allocation2 [shape = 'u8[200704]{0}', space=vmem, size = 0x31000, scoped, tag = 'input window, operand 1, single buffered']
    #allocation3 [shape = 's32[1]{0}', space=sflag, size = 0x4, scoped, tag = 'scoped memory for ann2h1d_forward.1']
    #allocation4 [shape = 'u8[4096]{0}', space=vmem, size = 0x1000, scoped, tag = 'output window, operand 0, single buffered']
    %12 = vsyncpa [#allocation3], 0
    // Predicated region
    $region2: #{ann2h1d_forward.1} parent=1 // pred_check
      _
    $region3: #{ann2h1d_forward.1} parent=1 // pred_check_branch
      %14 = sbr.rel (0) target = $region5
    $region4: #{ann2h1d_forward.1} parent=1 // pred_region
      _
    $region5: #{ann2h1d_forward.1} parent=1 // pred_fallthru
      _
    // Predicated region
    $region6: #{ann2h1d_forward.1} parent=1 // pred_check
      _
    $region7: #{ann2h1d_forward.1} parent=1 // pred_check_branch
      %16 = sbr.rel (0) target = $region9
    $region8: #{ann2h1d_forward.1} parent=1 // pred_region
      %s18 = ssub.s32 6272, 6272
      %19 = vsyncadd [#allocation3], %s18
      %s20 = sshll.u32 [#allocation2], 4
      %s21 = int_to_ptr.vmem [resolvable:$true] %s20
      %26 = dma.hbm_to_vmem [thread:$0]  %s1, 6272, %s21, [#allocation3], 64, 64, 4
    $region9: #{ann2h1d_forward.1} parent=1 // pred_fallthru
      _
    // Predicated region
    $region10: #{ann2h1d_forward.1} parent=1 // pred_check
      _
    $region11: #{ann2h1d_forward.1} parent=1 // pred_check_branch
      %28 = sbr.rel (0) target = $region13
    $region12: #{ann2h1d_forward.1} parent=1 // pred_region
      _
    $region13: #{ann2h1d_forward.1} parent=1 // pred_fallthru
      _
    // Predicated region
    $region14: #{ann2h1d_forward.1} parent=1 // pred_check
      _
    $region15: #{ann2h1d_forward.1} parent=1 // pred_check_branch
      %30 = sbr.rel (0) target = $region17
    $region16: #{ann2h1d_forward.1} parent=1 // pred_region
      _
    $region17: #{ann2h1d_forward.1} parent=1 // pred_fallthru
      _
    // Predicated region
    $region18: #{ann2h1d_forward.1} parent=1 // pred_check
      _
    $region19: #{ann2h1d_forward.1} parent=1 // pred_check_branch
      %32 = sbr.rel (0) target = $region21
    $region20: #{ann2h1d_forward.1} parent=1 // pred_region
      _
    $region21: #{ann2h1d_forward.1} parent=1 // pred_fallthru
      _
    // Predicated region
    $region22: #{ann2h1d_forward.1} parent=1 // pred_check
      _
    $region23: #{ann2h1d_forward.1} parent=1 // pred_check_branch
      %34 = sbr.rel (0) target = $region25
    $region24: #{ann2h1d_forward.1} parent=1 // pred_region
      _
    $region25: #{ann2h1d_forward.1} parent=1 // pred_fallthru
      _
    // Predicated region
    $region26: #{ann2h1d_forward.1} parent=1 // pred_check
      _
    $region27: #{ann2h1d_forward.1} parent=1 // pred_check_branch
      %36 = sbr.rel (0) target = $region29
    $region28: #{ann2h1d_forward.1} parent=1 // pred_region
      _
    $region29: #{ann2h1d_forward.1} parent=1 // pred_fallthru
      _
    // Predicated region
    $region30: #{ann2h1d_forward.1} parent=1 // pred_check
      _
    $region31: #{ann2h1d_forward.1} parent=1 // pred_check_branch
      %38 = sbr.rel (0) target = $region33
    $region32: #{ann2h1d_forward.1} parent=1 // pred_region
      %39 = dma.done [#allocation3], 6272
    $region33: #{ann2h1d_forward.1} parent=1 // pred_fallthru
      _
    %v41 = vld [vmem:[%s0] sm:$0xff]
    %v42 = vld [vmem:[%s0 + $0x8] sm:$0x3f]
    %v43 = vld [vmem:[%s0 + $0xe] sm:$0xff]
    %v44 = vld [vmem:[%s0 + $0x16] sm:$0x3f]
    %v45 = vld [vmem:[%s0 + $0x1c] sm:$0xff]
    %v46 = vld [vmem:[%s0 + $0x24] sm:$0x3f]
    %v47 = vld [vmem:[%s0 + $0x2a] sm:$0xff]
    %v48 = vld [vmem:[%s0 + $0x32] sm:$0x3f]
    %v49 = vld [vmem:[%s0 + $0x38] sm:$0xff]
    %v50 = vld [vmem:[%s0 + $0x40] sm:$0x3f]
    %v51 = vld [vmem:[%s0 + $0x46] sm:$0xff]
    %v52 = vld [vmem:[%s0 + $0x4e] sm:$0x3f]
    %v53 = vld [vmem:[%s0 + $0x54] sm:$0xff]
    %v54 = vld [vmem:[%s0 + $0x5c] sm:$0x3f]
    %v55 = vld [vmem:[%s0 + $0x62] sm:$0xff]
    %v56 = vld [vmem:[%s0 + $0x6a] sm:$0x3f]
    %v73 = vcombine.low %v41, %v43
    %v74 = vcombine.high %v41, %v43
    %v75 = vcombine.low %v45, %v47
    %v76 = vcombine.high %v45, %v47
    %v78 = vunpack.c.l.s4 1983009808
    %v79 = vunpack.c.0.s8 %v78
    %v80 = vlaneseq
    %v81 = vshrl.u32 %v80, 7
    %v82 = vsub.s32 %v79, %v81
    %v83 = vrot.slane %v73, %v82
    %v85 = vunpack.c.l.s4 1983009808
    %v86 = vunpack.c.0.s8 %v85
    %v87 = vlaneseq
    %v88 = vshrl.u32 %v87, 7
    %v89 = vsub.s32 %v86, %v88
    %v90 = vrot.slane %v74, %v89
    %v92 = vunpack.c.l.s4 1983009808
    %v93 = vunpack.c.0.s8 %v92
    %v94 = vlaneseq
    %v95 = vshrl.u32 %v94, 7
    %v96 = vsub.s32 %v93, %v95
    %v97 = vrot.slane %v75, %v96
    %v99 = vunpack.c.l.s4 1983009808
    %v100 = vunpack.c.0.s8 %v99
    %v101 = vlaneseq
    %v102 = vshrl.u32 %v101, 7
    %v103 = vsub.s32 %v100, %v102
    %v104 = vrot.slane %v76, %v103
    %v105 = vcombine.low %v83, %v97
    %v106 = vcombine.high %v83, %v97
    %v107 = vcombine.low %v90, %v104
    %v108 = vcombine.high %v90, %v104
    %v109 = vcombine.low %v42, %v44
    %v110 = vcombine.high %v42, %v44
    %v111 = vcombine.low %v46, %v48
    %v112 = vcombine.high %v46, %v48
    %v114 = vunpack.c.l.s4 1983009808
    %v115 = vunpack.c.0.s8 %v114
    %v116 = vlaneseq
    %v117 = vshrl.u32 %v116, 7
    %v118 = vsub.s32 %v115, %v117
    %v119 = vrot.slane %v109, %v118
    %v121 = vunpack.c.l.s4 1983009808
    %v122 = vunpack.c.0.s8 %v121
    %v123 = vlaneseq
    %v124 = vshrl.u32 %v123, 7
    %v125 = vsub.s32 %v122, %v124
    %v126 = vrot.slane %v110, %v125
    %v128 = vunpack.c.l.s4 1983009808
    %v129 = vunpack.c.0.s8 %v128
    %v130 = vlaneseq
    %v131 = vshrl.u32 %v130, 7
    %v132 = vsub.s32 %v129, %v131
    %v133 = vrot.slane %v111, %v132
    %v135 = vunpack.c.l.s4 1983009808
    %v136 = vunpack.c.0.s8 %v135
    %v137 = vlaneseq
    %v138 = vshrl.u32 %v137, 7
    %v139 = vsub.s32 %v136, %v138
    %v140 = vrot.slane %v112, %v139
    %v141 = vcombine.low %v119, %v133
    %v142 = vcombine.high %v119, %v133
    %v143 = vcombine.low %v126, %v140
    %v144 = vcombine.low %v49, %v51
    %v145 = vcombine.high %v49, %v51
    %v146 = vcombine.low %v53, %v55
    %v147 = vcombine.high %v53, %v55
    %v149 = vunpack.c.l.s4 1983009808
    %v150 = vunpack.c.0.s8 %v149
    %v151 = vlaneseq
    %v152 = vshrl.u32 %v151, 7
    %v153 = vsub.s32 %v150, %v152
    %v154 = vrot.slane %v144, %v153
    %v156 = vunpack.c.l.s4 1983009808
    %v157 = vunpack.c.0.s8 %v156
    %v158 = vlaneseq
    %v159 = vshrl.u32 %v158, 7
    %v160 = vsub.s32 %v157, %v159
    %v161 = vrot.slane %v145, %v160
    %v163 = vunpack.c.l.s4 1983009808
    %v164 = vunpack.c.0.s8 %v163
    %v165 = vlaneseq
    %v166 = vshrl.u32 %v165, 7
    %v167 = vsub.s32 %v164, %v166
    %v168 = vrot.slane %v146, %v167
    %v170 = vunpack.c.l.s4 1983009808
    %v171 = vunpack.c.0.s8 %v170
    %v172 = vlaneseq
    %v173 = vshrl.u32 %v172, 7
    %v174 = vsub.s32 %v171, %v173
    %v175 = vrot.slane %v147, %v174
    %v176 = vcombine.low %v154, %v168
    %v177 = vcombine.high %v154, %v168
    %v178 = vcombine.low %v161, %v175
    %v179 = vcombine.high %v161, %v175
    %v180 = vcombine.low %v50, %v52
    %v181 = vcombine.high %v50, %v52
    %v182 = vcombine.low %v54, %v56
    %v183 = vcombine.high %v54, %v56
    %v185 = vunpack.c.l.s4 1983009808
    %v186 = vunpack.c.0.s8 %v185
    %v187 = vlaneseq
    %v188 = vshrl.u32 %v187, 7
    %v189 = vsub.s32 %v186, %v188
    %v190 = vrot.slane %v180, %v189
    %v192 = vunpack.c.l.s4 1983009808
    %v193 = vunpack.c.0.s8 %v192
    %v194 = vlaneseq
    %v195 = vshrl.u32 %v194, 7
    %v196 = vsub.s32 %v193, %v195
    %v197 = vrot.slane %v181, %v196
    %v199 = vunpack.c.l.s4 1983009808
    %v200 = vunpack.c.0.s8 %v199
    %v201 = vlaneseq
    %v202 = vshrl.u32 %v201, 7
    %v203 = vsub.s32 %v200, %v202
    %v204 = vrot.slane %v182, %v203
    %v206 = vunpack.c.l.s4 1983009808
    %v207 = vunpack.c.0.s8 %v206
    %v208 = vlaneseq
    %v209 = vshrl.u32 %v208, 7
    %v210 = vsub.s32 %v207, %v209
    %v211 = vrot.slane %v183, %v210
    %v212 = vcombine.low %v190, %v204
    %v213 = vcombine.high %v190, %v204
    %v214 = vcombine.low %v197, %v211
    %v229 = vpack.c.bf16 %v176, %v105
    %v230 = vpack.c.bf16 %v177, %v106
    %v231 = vpack.c.bf16 %v178, %v107
    %v232 = vpack.c.bf16 %v179, %v108
    %v233 = vpack.c.bf16 %v212, %v141
    %v234 = vpack.c.bf16 %v213, %v142
    %v235 = vpack.c.bf16 %v214, %v143
    %v236 = vld [vmem:[#allocation2] sm:$0xf]
    %v237 = vld [vmem:[#allocation2 + $0x4] sm:$0xf]
    %v238 = vld [vmem:[#allocation2 + $0x8] sm:$0xf]
    %v239 = vld [vmem:[#allocation2 + $0xc] sm:$0xf]
    %v240 = vld [vmem:[#allocation2 + $0x10] sm:$0xf]
    %v241 = vld [vmem:[#allocation2 + $0x14] sm:$0xf]
    %v242 = vld [vmem:[#allocation2 + $0x18] sm:$0xf]
    %v243 = vld [vmem:[#allocation2 + $0x1c] sm:$0xf]
    %v244 = vld [vmem:[#allocation2 + $0x20] sm:$0xf]
    %v245 = vld [vmem:[#allocation2 + $0x24] sm:$0xf]
    %v246 = vld [vmem:[#allocation2 + $0x28] sm:$0xf]
    %v247 = vld [vmem:[#allocation2 + $0x2c] sm:$0xf]
    %v248 = vld [vmem:[#allocation2 + $0x30] sm:$0xf]
    %v249 = vld [vmem:[#allocation2 + $0x34] sm:$0xf]
    %v250 = vld [vmem:[#allocation2 + $0x38] sm:$0xf]
    %v251 = vld [vmem:[#allocation2 + $0x3c] sm:$0xf]
    %v252 = vld [vmem:[#allocation2 + $0x40] sm:$0xf]
    %v253 = vld [vmem:[#allocation2 + $0x44] sm:$0xf]
    %v254 = vld [vmem:[#allocation2 + $0x48] sm:$0xf]
    %v255 = vld [vmem:[#allocation2 + $0x4c] sm:$0xf]
    %v256 = vld [vmem:[#allocation2 + $0x50] sm:$0xf]
    %v257 = vld [vmem:[#allocation2 + $0x54] sm:$0xf]
    %v258 = vld [vmem:[#allocation2 + $0x58] sm:$0xf]
    %v259 = vld [vmem:[#allocation2 + $0x5c] sm:$0xf]
    %v260 = vld [vmem:[#allocation2 + $0x60] sm:$0xf]
    %v261 = vld [vmem:[#allocation2 + $0x64] sm:$0xf]
    %v262 = vld [vmem:[#allocation2 + $0x68] sm:$0xf]
    %v263 = vld [vmem:[#allocation2 + $0x6c] sm:$0xf]
    %v264 = vld [vmem:[#allocation2 + $0x70] sm:$0xf]
    %v265 = vld [vmem:[#allocation2 + $0x74] sm:$0xf]
    %v266 = vld [vmem:[#allocation2 + $0x78] sm:$0xf]
    %v267 = vld [vmem:[#allocation2 + $0x7c] sm:$0xf]
    %v268 = vld [vmem:[#allocation2 + $0x80] sm:$0xf]
    %v269 = vld [vmem:[#allocation2 + $0x84] sm:$0xf]
    %v270 = vld [vmem:[#allocation2 + $0x88] sm:$0xf]
    %v271 = vld [vmem:[#allocation2 + $0x8c] sm:$0xf]
    %v272 = vld [vmem:[#allocation2 + $0x90] sm:$0xf]
    %v273 = vld [vmem:[#allocation2 + $0x94] sm:$0xf]
    %v274 = vld [vmem:[#allocation2 + $0x98] sm:$0xf]
    %v275 = vld [vmem:[#allocation2 + $0x9c] sm:$0xf]
    %v276 = vld [vmem:[#allocation2 + $0xa0] sm:$0xf]
    %v277 = vld [vmem:[#allocation2 + $0xa4] sm:$0xf]
    %v278 = vld [vmem:[#allocation2 + $0xa8] sm:$0xf]
    %v279 = vld [vmem:[#allocation2 + $0xac] sm:$0xf]
    %v280 = vld [vmem:[#allocation2 + $0xb0] sm:$0xf]
    %v281 = vld [vmem:[#allocation2 + $0xb4] sm:$0xf]
    %v282 = vld [vmem:[#allocation2 + $0xb8] sm:$0xf]
    %v283 = vld [vmem:[#allocation2 + $0xbc] sm:$0xf]
    %v284 = vld [vmem:[#allocation2 + $0xc0] sm:$0xf]
    %v285 = vld [vmem:[#allocation2 + $0xc4] sm:$0xf]
    %v286 = vld [vmem:[#allocation2 + $0xc8] sm:$0xf]
    %v287 = vld [vmem:[#allocation2 + $0xcc] sm:$0xf]
    %v288 = vld [vmem:[#allocation2 + $0xd0] sm:$0xf]
    %v289 = vld [vmem:[#allocation2 + $0xd4] sm:$0xf]
    %v290 = vld [vmem:[#allocation2 + $0xd8] sm:$0xf]
    %v291 = vld [vmem:[#allocation2 + $0xdc] sm:$0xf]
    %v292 = vld [vmem:[#allocation2 + $0xe0] sm:$0xf]
    %v293 = vld [vmem:[#allocation2 + $0xe4] sm:$0xf]
    %v294 = vld [vmem:[#allocation2 + $0xe8] sm:$0xf]
    %v295 = vld [vmem:[#allocation2 + $0xec] sm:$0xf]
    %v296 = vld [vmem:[#allocation2 + $0xf0] sm:$0xf]
    %v297 = vld [vmem:[#allocation2 + $0xf4] sm:$0xf]
    %v298 = vld [vmem:[#allocation2 + $0xf8] sm:$0xf]
    %v299 = vld [vmem:[#allocation2 + $0xfc] sm:$0xf]
    %v300 = vld [vmem:[#allocation2 + $0x100] sm:$0xf]
    %v301 = vld [vmem:[#allocation2 + $0x104] sm:$0xf]
    %v302 = vld [vmem:[#allocation2 + $0x108] sm:$0xf]
    %v303 = vld [vmem:[#allocation2 + $0x10c] sm:$0xf]
    %v304 = vld [vmem:[#allocation2 + $0x110] sm:$0xf]
    %v305 = vld [vmem:[#allocation2 + $0x114] sm:$0xf]
    %v306 = vld [vmem:[#allocation2 + $0x118] sm:$0xf]
    %v307 = vld [vmem:[#allocation2 + $0x11c] sm:$0xf]
    %v308 = vld [vmem:[#allocation2 + $0x120] sm:$0xf]
    %v309 = vld [vmem:[#allocation2 + $0x124] sm:$0xf]
    %v310 = vld [vmem:[#allocation2 + $0x128] sm:$0xf]
    %v311 = vld [vmem:[#allocation2 + $0x12c] sm:$0xf]
    %v312 = vld [vmem:[#allocation2 + $0x130] sm:$0xf]
    %v313 = vld [vmem:[#allocation2 + $0x134] sm:$0xf]
    %v314 = vld [vmem:[#allocation2 + $0x138] sm:$0xf]
    %v315 = vld [vmem:[#allocation2 + $0x13c] sm:$0xf]
    %v316 = vld [vmem:[#allocation2 + $0x140] sm:$0xf]
    %v317 = vld [vmem:[#allocation2 + $0x144] sm:$0xf]
    %v318 = vld [vmem:[#allocation2 + $0x148] sm:$0xf]
    %v319 = vld [vmem:[#allocation2 + $0x14c] sm:$0xf]
    %v320 = vld [vmem:[#allocation2 + $0x150] sm:$0xf]
    %v321 = vld [vmem:[#allocation2 + $0x154] sm:$0xf]
    %v322 = vld [vmem:[#allocation2 + $0x158] sm:$0xf]
    %v323 = vld [vmem:[#allocation2 + $0x15c] sm:$0xf]
    %v324 = vld [vmem:[#allocation2 + $0x160] sm:$0xf]
    %v325 = vld [vmem:[#allocation2 + $0x164] sm:$0xf]
    %v326 = vld [vmem:[#allocation2 + $0x168] sm:$0xf]
    %v327 = vld [vmem:[#allocation2 + $0x16c] sm:$0xf]
    %v328 = vld [vmem:[#allocation2 + $0x170] sm:$0xf]
    %v329 = vld [vmem:[#allocation2 + $0x174] sm:$0xf]
    %v330 = vld [vmem:[#allocation2 + $0x178] sm:$0xf]
    %v331 = vld [vmem:[#allocation2 + $0x17c] sm:$0xf]
    %v332 = vld [vmem:[#allocation2 + $0x180] sm:$0xf]
    %v333 = vld [vmem:[#allocation2 + $0x184] sm:$0xf]
    %v334 = vld [vmem:[%s2] sm:$0x1]
    %v336 = vlaneseq
    %v337 = vshrl.u32 %v336, 7
    %v338 = vsub.s32 0, %v337
    %v339 = vrot.slane %v334, %v338
    %v439 = vunpack.c.l.b16 %v236
    %v440 = vunpack.c.l.b16 %v237
    %v441 = vunpack.c.l.b16 %v238
    %v442 = vunpack.c.l.b16 %v239
    %v443 = vunpack.c.l.b16 %v240
    %v444 = vunpack.c.l.b16 %v241
    %v445 = vunpack.c.l.b16 %v242
    %v446 = vunpack.c.l.b16 %v243
    %v447 = vunpack.c.l.b16 %v244
    %v448 = vunpack.c.l.b16 %v245
    %v449 = vunpack.c.l.b16 %v246
    %v450 = vunpack.c.l.b16 %v247
    %v451 = vunpack.c.l.b16 %v248
    %v452 = vunpack.c.l.b16 %v249
    %v453 = vunpack.c.l.b16 %v250
    %v454 = vunpack.c.l.b16 %v251
    %v455 = vunpack.c.l.b16 %v252
    %v456 = vunpack.c.l.b16 %v253
    %v457 = vunpack.c.l.b16 %v254
    %v458 = vunpack.c.l.b16 %v255
    %v459 = vunpack.c.l.b16 %v256
    %v460 = vunpack.c.l.b16 %v257
    %v461 = vunpack.c.l.b16 %v258
    %v462 = vunpack.c.l.b16 %v259
    %v463 = vunpack.c.l.b16 %v260
    %v464 = vunpack.c.l.b16 %v261
    %v465 = vunpack.c.l.b16 %v262
    %v466 = vunpack.c.l.b16 %v263
    %v467 = vunpack.c.l.b16 %v264
    %v468 = vunpack.c.l.b16 %v265
    %v469 = vunpack.c.l.b16 %v266
    %v470 = vunpack.c.l.b16 %v267
    %v471 = vunpack.c.l.b16 %v268
    %v472 = vunpack.c.l.b16 %v269
    %v473 = vunpack.c.l.b16 %v270
    %v474 = vunpack.c.l.b16 %v271
    %v475 = vunpack.c.l.b16 %v272
    %v476 = vunpack.c.l.b16 %v273
    %v477 = vunpack.c.l.b16 %v274
    %v478 = vunpack.c.l.b16 %v275
    %v479 = vunpack.c.l.b16 %v276
    %v480 = vunpack.c.l.b16 %v277
    %v481 = vunpack.c.l.b16 %v278
    %v482 = vunpack.c.l.b16 %v279
    %v483 = vunpack.c.l.b16 %v280
    %v484 = vunpack.c.l.b16 %v281
    %v485 = vunpack.c.l.b16 %v282
    %v486 = vunpack.c.l.b16 %v283
    %v487 = vunpack.c.l.b16 %v284
    %v488 = vunpack.c.l.b16 %v285
    %v489 = vunpack.c.l.b16 %v286
    %v490 = vunpack.c.l.b16 %v287
    %v491 = vunpack.c.l.b16 %v288
    %v492 = vunpack.c.l.b16 %v289
    %v493 = vunpack.c.l.b16 %v290
    %v494 = vunpack.c.l.b16 %v291
    %v495 = vunpack.c.l.b16 %v292
    %v496 = vunpack.c.l.b16 %v293
    %v497 = vunpack.c.l.b16 %v294
    %v498 = vunpack.c.l.b16 %v295
    %v499 = vunpack.c.l.b16 %v296
    %v500 = vunpack.c.l.b16 %v297
    %v501 = vunpack.c.l.b16 %v298
    %v502 = vunpack.c.l.b16 %v299
    %v503 = vunpack.c.l.b16 %v300
    %v504 = vunpack.c.l.b16 %v301
    %v505 = vunpack.c.l.b16 %v302
    %v506 = vunpack.c.l.b16 %v303
    %v507 = vunpack.c.l.b16 %v304
    %v508 = vunpack.c.l.b16 %v305
    %v509 = vunpack.c.l.b16 %v306
    %v510 = vunpack.c.l.b16 %v307
    %v511 = vunpack.c.l.b16 %v308
    %v512 = vunpack.c.l.b16 %v309
    %v513 = vunpack.c.l.b16 %v310
    %v514 = vunpack.c.l.b16 %v311
    %v515 = vunpack.c.l.b16 %v312
    %v516 = vunpack.c.l.b16 %v313
    %v517 = vunpack.c.l.b16 %v314
    %v518 = vunpack.c.l.b16 %v315
    %v519 = vunpack.c.l.b16 %v316
    %v520 = vunpack.c.l.b16 %v317
    %v521 = vunpack.c.l.b16 %v318
    %v522 = vunpack.c.l.b16 %v319
    %v523 = vunpack.c.l.b16 %v320
    %v524 = vunpack.c.l.b16 %v321
    %v525 = vunpack.c.l.b16 %v322
    %v526 = vunpack.c.l.b16 %v323
    %v527 = vunpack.c.l.b16 %v324
    %v528 = vunpack.c.l.b16 %v325
    %v529 = vunpack.c.l.b16 %v326
    %v530 = vunpack.c.l.b16 %v327
    %v531 = vunpack.c.l.b16 %v328
    %v532 = vunpack.c.l.b16 %v329
    %v533 = vunpack.c.l.b16 %v330
    %v534 = vunpack.c.l.b16 %v331
    %v535 = vunpack.c.l.b16 %v332
    %v536 = vunpack.c.l.b16 %v333
    %v537 = vpack.c.b16 %v440, %v439
    %v538 = vpack.c.b16 %v442, %v441
    %v539 = vpack.c.b16 %v444, %v443
    %v540 = vpack.c.b16 %v446, %v445
    %v541 = vpack.c.b16 %v448, %v447
    %v542 = vpack.c.b16 %v450, %v449
    %v543 = vpack.c.b16 %v452, %v451
    %v544 = vpack.c.b16 %v454, %v453
    %v545 = vpack.c.b16 %v456, %v455
    %v546 = vpack.c.b16 %v458, %v457
    %v547 = vpack.c.b16 %v460, %v459
    %v548 = vpack.c.b16 %v462, %v461
    %v549 = vpack.c.b16 %v464, %v463
    %v550 = vpack.c.b16 %v466, %v465
    %v551 = vpack.c.b16 %v468, %v467
    %v552 = vpack.c.b16 %v470, %v469
    %v553 = vpack.c.b16 %v472, %v471
    %v554 = vpack.c.b16 %v474, %v473
    %v555 = vpack.c.b16 %v476, %v475
    %v556 = vpack.c.b16 %v478, %v477
    %v557 = vpack.c.b16 %v480, %v479
    %v558 = vpack.c.b16 %v482, %v481
    %v559 = vpack.c.b16 %v484, %v483
    %v560 = vpack.c.b16 %v486, %v485
    %v561 = vpack.c.b16 %v488, %v487
    %v562 = vpack.c.b16 %v490, %v489
    %v563 = vpack.c.b16 %v492, %v491
    %v564 = vpack.c.b16 %v494, %v493
    %v565 = vpack.c.b16 %v496, %v495
    %v566 = vpack.c.b16 %v498, %v497
    %v567 = vpack.c.b16 %v500, %v499
    %v568 = vpack.c.b16 %v502, %v501
    %v569 = vpack.c.b16 %v504, %v503
    %v570 = vpack.c.b16 %v506, %v505
    %v571 = vpack.c.b16 %v508, %v507
    %v572 = vpack.c.b16 %v510, %v509
    %v573 = vpack.c.b16 %v512, %v511
    %v574 = vpack.c.b16 %v514, %v513
    %v575 = vpack.c.b16 %v516, %v515
    %v576 = vpack.c.b16 %v518, %v517
    %v577 = vpack.c.b16 %v520, %v519
    %v578 = vpack.c.b16 %v522, %v521
    %v579 = vpack.c.b16 %v524, %v523
    %v580 = vpack.c.b16 %v526, %v525
    %v581 = vpack.c.b16 %v528, %v527
    %v582 = vpack.c.b16 %v530, %v529
    %v583 = vpack.c.b16 %v532, %v531
    %v584 = vpack.c.b16 %v534, %v533
    %v585 = vpack.c.b16 %v536, %v535
    %vm635 = vcmask 130048
    %v637 = vsel %vm635, %v235, 0
    %639 = vmatprep.subr.bf16.mxu0 0
    %640 = vmatpush1.bf16.msra.mxu0 %v544
    %641 = vmatprep.subr.bf16.mxu0 0
    %642 = vmatpush1.bf16.msra.mxu0 %v543
    %643 = vmatprep.subr.bf16.mxu0 0
    %644 = vmatpush1.bf16.msra.mxu0 %v542
    %645 = vmatprep.subr.bf16.mxu0 0
    %646 = vmatpush1.bf16.msra.mxu0 %v541
    %647 = vmatprep.subr.bf16.mxu0 0
    %648 = vmatpush1.bf16.msra.mxu0 %v540
    %649 = vmatprep.subr.bf16.mxu0 0
    %650 = vmatpush1.bf16.msra.mxu0 %v539
    %651 = vmatprep.subr.bf16.mxu0 0
    %652 = vmatpush1.bf16.msra.mxu0 %v538
    %653 = vmatprep.subr.bf16.mxu0 0
    %654 = vmatpush1.bf16.msra.mxu0 %v537
    %655 = vmatprep.subr.bf16.mxu0 0
    %656 = vmatpush2.bf16.msra.mxu0 %v552
    %657 = vmatprep.subr.bf16.mxu0 0
    %658 = vmatpush2.bf16.msra.mxu0 %v551
    %659 = vmatprep.subr.bf16.mxu0 0
    %660 = vmatpush2.bf16.msra.mxu0 %v550
    %661 = vmatprep.subr.bf16.mxu0 0
    %662 = vmatpush2.bf16.msra.mxu0 %v549
    %663 = vmatprep.subr.bf16.mxu0 0
    %664 = vmatpush2.bf16.msra.mxu0 %v548
    %665 = vmatprep.subr.bf16.mxu0 0
    %666 = vmatpush2.bf16.msra.mxu0 %v547
    %667 = vmatprep.subr.bf16.mxu0 0
    %668 = vmatpush2.bf16.msra.mxu0 %v546
    %669 = vmatprep.subr.bf16.mxu0 0
    %670 = vmatpush2.bf16.msra.mxu0 %v545
    %671 = vmatprep.mubr.bf16.mxu0 %v230
    %672 = vmatmul.mubr.bf16.gmra.mxu0 %v229
    %v673 = vpop.f32.mrf.mxu0
    %v674 = vadd.f32 %v339, %v673
    %v675 = vpop.f32.mrf.mxu0
    %v676 = vpop.f32.mrf.mxu0
    %v677 = vadd.f32 %v339, %v676
    %v678 = vpop.f32.mrf.mxu0
    %679 = vdwg.mxu0
    %680 = vmatprep.subr.bf16.mxu0 0
    %681 = vmatpush1.bf16.msra.mxu0 %v560
    %682 = vmatprep.subr.bf16.mxu0 0
    %683 = vmatpush1.bf16.msra.mxu0 %v559
    %684 = vmatprep.subr.bf16.mxu0 0
    %685 = vmatpush1.bf16.msra.mxu0 %v558
    %686 = vmatprep.subr.bf16.mxu0 0
    %687 = vmatpush1.bf16.msra.mxu0 %v557
    %688 = vmatprep.subr.bf16.mxu0 0
    %689 = vmatpush1.bf16.msra.mxu0 %v556
    %690 = vmatprep.subr.bf16.mxu0 0
    %691 = vmatpush1.bf16.msra.mxu0 %v555
    %692 = vmatprep.subr.bf16.mxu0 0
    %693 = vmatpush1.bf16.msra.mxu0 %v554
    %694 = vmatprep.subr.bf16.mxu0 0
    %695 = vmatpush1.bf16.msra.mxu0 %v553
    %696 = vmatprep.subr.bf16.mxu0 0
    %697 = vmatpush2.bf16.msra.mxu0 %v568
    %698 = vmatprep.subr.bf16.mxu0 0
    %699 = vmatpush2.bf16.msra.mxu0 %v567
    %700 = vmatprep.subr.bf16.mxu0 0
    %701 = vmatpush2.bf16.msra.mxu0 %v566
    %702 = vmatprep.subr.bf16.mxu0 0
    %703 = vmatpush2.bf16.msra.mxu0 %v565
    %704 = vmatprep.subr.bf16.mxu0 0
    %705 = vmatpush2.bf16.msra.mxu0 %v564
    %706 = vmatprep.subr.bf16.mxu0 0
    %707 = vmatpush2.bf16.msra.mxu0 %v563
    %708 = vmatprep.subr.bf16.mxu0 0
    %709 = vmatpush2.bf16.msra.mxu0 %v562
    %710 = vmatprep.subr.bf16.mxu0 0
    %711 = vmatpush2.bf16.msra.mxu0 %v561
    %712 = vmatprep.mubr.bf16.mxu0 %v232
    %713 = vmatmul.mubr.bf16.gmra.mxu0 %v231
    %v714 = vpop.f32.mrf.mxu0
    %v715 = vadd.f32 %v674, %v714
    %v716 = vpop.f32.mrf.mxu0
    %v717 = vpop.f32.mrf.mxu0
    %v718 = vadd.f32 %v677, %v717
    %v719 = vpop.f32.mrf.mxu0
    %720 = vdwg.mxu0
    %721 = vmatprep.subr.bf16.mxu0 0
    %722 = vmatpush1.bf16.msra.mxu0 %v576
    %723 = vmatprep.subr.bf16.mxu0 0
    %724 = vmatpush1.bf16.msra.mxu0 %v575
    %725 = vmatprep.subr.bf16.mxu0 0
    %726 = vmatpush1.bf16.msra.mxu0 %v574
    %727 = vmatprep.subr.bf16.mxu0 0
    %728 = vmatpush1.bf16.msra.mxu0 %v573
    %729 = vmatprep.subr.bf16.mxu0 0
    %730 = vmatpush1.bf16.msra.mxu0 %v572
    %731 = vmatprep.subr.bf16.mxu0 0
    %732 = vmatpush1.bf16.msra.mxu0 %v571
    %733 = vmatprep.subr.bf16.mxu0 0
    %734 = vmatpush1.bf16.msra.mxu0 %v570
    %735 = vmatprep.subr.bf16.mxu0 0
    %736 = vmatpush1.bf16.msra.mxu0 %v569
    %737 = vmatprep.subr.bf16.mxu0 0
    %738 = vmatpush2.bf16.msra.mxu0 %v584
    %739 = vmatprep.subr.bf16.mxu0 0
    %740 = vmatpush2.bf16.msra.mxu0 %v583
    %741 = vmatprep.subr.bf16.mxu0 0
    %742 = vmatpush2.bf16.msra.mxu0 %v582
    %743 = vmatprep.subr.bf16.mxu0 0
    %744 = vmatpush2.bf16.msra.mxu0 %v581
    %745 = vmatprep.subr.bf16.mxu0 0
    %746 = vmatpush2.bf16.msra.mxu0 %v580
    %747 = vmatprep.subr.bf16.mxu0 0
    %748 = vmatpush2.bf16.msra.mxu0 %v579
    %749 = vmatprep.subr.bf16.mxu0 0
    %750 = vmatpush2.bf16.msra.mxu0 %v578
    %751 = vmatprep.subr.bf16.mxu0 0
    %752 = vmatpush2.bf16.msra.mxu0 %v577
    %753 = vmatprep.mubr.bf16.mxu0 %v234
    %754 = vmatmul.mubr.bf16.gmra.mxu0 %v233
    %v755 = vpop.f32.mrf.mxu0
    %v756 = vadd.f32 %v715, %v755
    %v757 = vpop.f32.mrf.mxu0
    %v758 = vpop.f32.mrf.mxu0
    %v759 = vadd.f32 %v718, %v758
    %v760 = vpop.f32.mrf.mxu0
    %761 = vdwg.mxu0
    %762 = vmatprep.subr.bf16.mxu0 0
    %763 = vmatpush1.bf16.msra.mxu0 0
    %764 = vmatprep.subr.bf16.mxu0 0
    %765 = vmatpush1.bf16.msra.mxu0 0
    %766 = vmatprep.subr.bf16.mxu0 0
    %767 = vmatpush1.bf16.msra.mxu0 0
    %768 = vmatprep.subr.bf16.mxu0 0
    %769 = vmatpush1.bf16.msra.mxu0 0
    %770 = vmatprep.subr.bf16.mxu0 0
    %771 = vmatpush1.bf16.msra.mxu0 0
    %772 = vmatprep.subr.bf16.mxu0 0
    %773 = vmatpush1.bf16.msra.mxu0 0
    %774 = vmatprep.subr.bf16.mxu0 0
    %775 = vmatpush1.bf16.msra.mxu0 0
    %776 = vmatprep.subr.bf16.mxu0 0
    %777 = vmatpush1.bf16.msra.mxu0 %v585
    %778 = vmatprep.subr.bf16.mxu0 0
    %779 = vmatpush2.bf16.msra.mxu0 0
    %780 = vmatprep.subr.bf16.mxu0 0
    %781 = vmatpush2.bf16.msra.mxu0 0
    %782 = vmatprep.subr.bf16.mxu0 0
    %783 = vmatpush2.bf16.msra.mxu0 0
    %784 = vmatprep.subr.bf16.mxu0 0
    %785 = vmatpush2.bf16.msra.mxu0 0
    %786 = vmatprep.subr.bf16.mxu0 0
    %787 = vmatpush2.bf16.msra.mxu0 0
    %788 = vmatprep.subr.bf16.mxu0 0
    %789 = vmatpush2.bf16.msra.mxu0 0
    %790 = vmatprep.subr.bf16.mxu0 0
    %791 = vmatpush2.bf16.msra.mxu0 0
    %792 = vmatprep.subr.bf16.mxu0 0
    %793 = vmatpush2.bf16.msra.mxu0 0
    %794 = vmatprep.mubr.bf16.mxu0 0
    %795 = vmatmul.mubr.bf16.gmra.mxu0 %v637
    %v796 = vpop.f32.mrf.mxu0
    %v797 = vadd.f32 %v756, %v796
    %v798 = vpop.f32.mrf.mxu0
    %v799 = vpop.f32.mrf.mxu0
    %v800 = vadd.f32 %v759, %v799
    %v801 = vpop.f32.mrf.mxu0
    %802 = vdwg.mxu0
    %v803 = vmax.f32 %v797, 0.0
    %v804 = vmax.f32 %v800, 0.0
    %v805 = vpack.c.bf16 %v804, %v803
    %v806 = vld [vmem:[%s3] sm:$0xf]
    %v807 = vld [vmem:[%s3 + $0x4] sm:$0xf]
    %v808 = vld [vmem:[%s3 + $0x8] sm:$0xf]
    %v809 = vld [vmem:[%s3 + $0xc] sm:$0xf]
    %v810 = vld [vmem:[%s3 + $0x10] sm:$0xf]
    %v811 = vld [vmem:[%s3 + $0x14] sm:$0xf]
    %v812 = vld [vmem:[%s3 + $0x18] sm:$0xf]
    %v813 = vld [vmem:[%s3 + $0x1c] sm:$0xf]
    %v814 = vld [vmem:[%s3 + $0x20] sm:$0xf]
    %v815 = vld [vmem:[%s3 + $0x24] sm:$0xf]
    %v816 = vld [vmem:[%s3 + $0x28] sm:$0xf]
    %v817 = vld [vmem:[%s3 + $0x2c] sm:$0xf]
    %v818 = vld [vmem:[%s3 + $0x30] sm:$0xf]
    %v819 = vld [vmem:[%s3 + $0x34] sm:$0xf]
    %v820 = vld [vmem:[%s3 + $0x38] sm:$0xf]
    %v821 = vld [vmem:[%s3 + $0x3c] sm:$0xf]
    %v822 = vld [vmem:[%s4] sm:$0x1]
    %v824 = vlaneseq
    %v825 = vshrl.u32 %v824, 7
    %v826 = vsub.s32 0, %v825
    %v827 = vrot.slane %v822, %v826
    %v845 = vunpack.c.l.b16 %v806
    %v846 = vunpack.c.l.b16 %v807
    %v847 = vunpack.c.l.b16 %v808
    %v848 = vunpack.c.l.b16 %v809
    %v849 = vunpack.c.l.b16 %v810
    %v850 = vunpack.c.l.b16 %v811
    %v851 = vunpack.c.l.b16 %v812
    %v852 = vunpack.c.l.b16 %v813
    %v853 = vunpack.c.l.b16 %v814
    %v854 = vunpack.c.l.b16 %v815
    %v855 = vunpack.c.l.b16 %v816
    %v856 = vunpack.c.l.b16 %v817
    %v857 = vunpack.c.l.b16 %v818
    %v858 = vunpack.c.l.b16 %v819
    %v859 = vunpack.c.l.b16 %v820
    %v860 = vunpack.c.l.b16 %v821
    %v861 = vpack.c.b16 %v846, %v845
    %v862 = vpack.c.b16 %v848, %v847
    %v863 = vpack.c.b16 %v850, %v849
    %v864 = vpack.c.b16 %v852, %v851
    %v865 = vpack.c.b16 %v854, %v853
    %v866 = vpack.c.b16 %v856, %v855
    %v867 = vpack.c.b16 %v858, %v857
    %v868 = vpack.c.b16 %v860, %v859
    %877 = vmatprep.subr.bf16.mxu0 0
    %878 = vmatpush1.bf16.msra.mxu0 %v868
    %879 = vmatprep.subr.bf16.mxu0 0
    %880 = vmatpush1.bf16.msra.mxu0 %v867
    %881 = vmatprep.subr.bf16.mxu0 0
    %882 = vmatpush1.bf16.msra.mxu0 %v866
    %883 = vmatprep.subr.bf16.mxu0 0
    %884 = vmatpush1.bf16.msra.mxu0 %v865
    %885 = vmatprep.subr.bf16.mxu0 0
    %886 = vmatpush1.bf16.msra.mxu0 %v864
    %887 = vmatprep.subr.bf16.mxu0 0
    %888 = vmatpush1.bf16.msra.mxu0 %v863
    %889 = vmatprep.subr.bf16.mxu0 0
    %890 = vmatpush1.bf16.msra.mxu0 %v862
    %891 = vmatprep.subr.bf16.mxu0 0
    %892 = vmatpush1.bf16.msra.mxu0 %v861
    %893 = vmatprep.subr.bf16.mxu0 0
    %894 = vmatpush2.bf16.msra.mxu0 0
    %895 = vmatprep.subr.bf16.mxu0 0
    %896 = vmatpush2.bf16.msra.mxu0 0
    %897 = vmatprep.subr.bf16.mxu0 0
    %898 = vmatpush2.bf16.msra.mxu0 0
    %899 = vmatprep.subr.bf16.mxu0 0
    %900 = vmatpush2.bf16.msra.mxu0 0
    %901 = vmatprep.subr.bf16.mxu0 0
    %902 = vmatpush2.bf16.msra.mxu0 0
    %903 = vmatprep.subr.bf16.mxu0 0
    %904 = vmatpush2.bf16.msra.mxu0 0
    %905 = vmatprep.subr.bf16.mxu0 0
    %906 = vmatpush2.bf16.msra.mxu0 0
    %907 = vmatprep.subr.bf16.mxu0 0
    %908 = vmatpush2.bf16.msra.mxu0 0
    %909 = vmatprep.mubr.bf16.mxu0 0
    %910 = vmatmul.mubr.bf16.gmra.mxu0 %v805
    %v911 = vpop.f32.mrf.mxu0
    %v912 = vadd.f32 %v827, %v911
    %v913 = vpop.f32.mrf.mxu0
    %v914 = vpop.f32.mrf.mxu0
    %v915 = vadd.f32 %v827, %v914
    %v916 = vpop.f32.mrf.mxu0
    %917 = vdwg.mxu0
    %v918 = vmax.f32 %v912, 0.0
    %v919 = vmax.f32 %v915, 0.0
    %v920 = vpack.c.bf16 %v919, %v918
    %v921 = vld [vmem:[%s5] sm:$0xf]
    %v922 = vld [vmem:[%s5 + $0x4] sm:$0xf]
    %v923 = vld [vmem:[%s5 + $0x8] sm:$0xf]
    %v924 = vld [vmem:[%s5 + $0xc] sm:$0xf]
    %v925 = vld [vmem:[%s5 + $0x10] sm:$0xf]
    %v926 = vld [vmem:[%s5 + $0x14] sm:$0xf]
    %v927 = vld [vmem:[%s5 + $0x18] sm:$0xf]
    %v928 = vld [vmem:[%s5 + $0x1c] sm:$0xf]
    %v929 = vld [vmem:[%s5 + $0x20] sm:$0xf]
    %v930 = vld [vmem:[%s5 + $0x24] sm:$0xf]
    %v931 = vld [vmem:[%s5 + $0x28] sm:$0xf]
    %v932 = vld [vmem:[%s5 + $0x2c] sm:$0xf]
    %v933 = vld [vmem:[%s5 + $0x30] sm:$0xf]
    %v934 = vld [vmem:[%s5 + $0x34] sm:$0xf]
    %v935 = vld [vmem:[%s5 + $0x38] sm:$0xf]
    %v936 = vld [vmem:[%s5 + $0x3c] sm:$0xf]
    %v937 = vld [vmem:[%s6] sm:$0x1]
    %v939 = vlaneseq
    %v940 = vshrl.u32 %v939, 7
    %v941 = vsub.s32 0, %v940
    %v942 = vrot.slane %v937, %v941
    %v960 = vunpack.c.l.b16 %v921
    %v961 = vunpack.c.l.b16 %v922
    %v962 = vunpack.c.l.b16 %v923
    %v963 = vunpack.c.l.b16 %v924
    %v964 = vunpack.c.l.b16 %v925
    %v965 = vunpack.c.l.b16 %v926
    %v966 = vunpack.c.l.b16 %v927
    %v967 = vunpack.c.l.b16 %v928
    %v968 = vunpack.c.l.b16 %v929
    %v969 = vunpack.c.l.b16 %v930
    %v970 = vunpack.c.l.b16 %v931
    %v971 = vunpack.c.l.b16 %v932
    %v972 = vunpack.c.l.b16 %v933
    %v973 = vunpack.c.l.b16 %v934
    %v974 = vunpack.c.l.b16 %v935
    %v975 = vunpack.c.l.b16 %v936
    %v976 = vpack.c.b16 %v961, %v960
    %v977 = vpack.c.b16 %v963, %v962
    %v978 = vpack.c.b16 %v965, %v964
    %v979 = vpack.c.b16 %v967, %v966
    %v980 = vpack.c.b16 %v969, %v968
    %v981 = vpack.c.b16 %v971, %v970
    %v982 = vpack.c.b16 %v973, %v972
    %v983 = vpack.c.b16 %v975, %v974
    %992 = vmatprep.subr.bf16.mxu0 0
    %993 = vmatpush1.bf16.msra.mxu0 %v983
    %994 = vmatprep.subr.bf16.mxu0 0
    %995 = vmatpush1.bf16.msra.mxu0 %v982
    %996 = vmatprep.subr.bf16.mxu0 0
    %997 = vmatpush1.bf16.msra.mxu0 %v981
    %998 = vmatprep.subr.bf16.mxu0 0
    %999 = vmatpush1.bf16.msra.mxu0 %v980
    %1000 = vmatprep.subr.bf16.mxu0 0
    %1001 = vmatpush1.bf16.msra.mxu0 %v979
    %1002 = vmatprep.subr.bf16.mxu0 0
    %1003 = vmatpush1.bf16.msra.mxu0 %v978
    %1004 = vmatprep.subr.bf16.mxu0 0
    %1005 = vmatpush1.bf16.msra.mxu0 %v977
    %1006 = vmatprep.subr.bf16.mxu0 0
    %1007 = vmatpush1.bf16.msra.mxu0 %v976
    %1008 = vmatprep.subr.bf16.mxu0 0
    %1009 = vmatpush2.bf16.msra.mxu0 0
    %1010 = vmatprep.subr.bf16.mxu0 0
    %1011 = vmatpush2.bf16.msra.mxu0 0
    %1012 = vmatprep.subr.bf16.mxu0 0
    %1013 = vmatpush2.bf16.msra.mxu0 0
    %1014 = vmatprep.subr.bf16.mxu0 0
    %1015 = vmatpush2.bf16.msra.mxu0 0
    %1016 = vmatprep.subr.bf16.mxu0 0
    %1017 = vmatpush2.bf16.msra.mxu0 0
    %1018 = vmatprep.subr.bf16.mxu0 0
    %1019 = vmatpush2.bf16.msra.mxu0 0
    %1020 = vmatprep.subr.bf16.mxu0 0
    %1021 = vmatpush2.bf16.msra.mxu0 0
    %1022 = vmatprep.subr.bf16.mxu0 0
    %1023 = vmatpush2.bf16.msra.mxu0 0
    %1024 = vmatprep.mubr.bf16.mxu0 0
    %1025 = vmatmul.mubr.bf16.gmra.mxu0 %v920
    %v1026 = vpop.f32.mrf.mxu0
    %v1027 = vadd.f32 %v942, %v1026
    %v1028 = vpop.f32.mrf.mxu0
    %v1029 = vpop.f32.mrf.mxu0
    %v1030 = vadd.f32 %v942, %v1029
    %v1031 = vpop.f32.mrf.mxu0
    %1032 = vdwg.mxu0
    %v1033 = vpack.c.bf16 %v1030, %v1027
    %v1035 = vcombine.high %v1033, %v1033
    %v1037 = vunpack.c.l.s4 1966171168
    %v1038 = vunpack.c.0.s8 %v1037
    %v1039 = vlaneseq
    %v1040 = vshrl.u32 %v1039, 7
    %v1041 = vsub.s32 %v1038, %v1040
    %v1042 = vrot.slane %v1033, %v1041
    %v1044 = vunpack.c.l.s4 1966171168
    %v1045 = vunpack.c.0.s8 %v1044
    %v1046 = vlaneseq
    %v1047 = vshrl.u32 %v1046, 7
    %v1048 = vsub.s32 %v1045, %v1047
    %v1049 = vrot.slane %v1035, %v1048
    %v1050 = vcombine.high %v1042, %v1042
    %v1051 = vcombine.high %v1049, %v1049
    %v1053 = vunpack.c.l.s4 1966171168
    %v1054 = vunpack.c.0.s8 %v1053
    %v1055 = vlaneseq
    %v1056 = vshrl.u32 %v1055, 7
    %v1057 = vsub.s32 %v1054, %v1056
    %v1058 = vrot.slane %v1042, %v1057
    %v1060 = vunpack.c.l.s4 1966171168
    %v1061 = vunpack.c.0.s8 %v1060
    %v1062 = vlaneseq
    %v1063 = vshrl.u32 %v1062, 7
    %v1064 = vsub.s32 %v1061, %v1063
    %v1065 = vrot.slane %v1049, %v1064
    %v1067 = vunpack.c.l.s4 1966171168
    %v1068 = vunpack.c.0.s8 %v1067
    %v1069 = vlaneseq
    %v1070 = vshrl.u32 %v1069, 7
    %v1071 = vsub.s32 %v1068, %v1070
    %v1072 = vrot.slane %v1050, %v1071
    %v1074 = vunpack.c.l.s4 1966171168
    %v1075 = vunpack.c.0.s8 %v1074
    %v1076 = vlaneseq
    %v1077 = vshrl.u32 %v1076, 7
    %v1078 = vsub.s32 %v1075, %v1077
    %v1079 = vrot.slane %v1051, %v1078
    %v1080 = vcombine.high %v1058, %v1058
    %v1081 = vcombine.high %v1065, %v1065
    %v1082 = vcombine.high %v1072, %v1072
    %v1083 = vcombine.high %v1079, %v1079
    %1092 = vst [vmem:[#allocation4] sm:$0x1] %v1058
    %1093 = vst [vmem:[#allocation4 + $0x1] sm:$0x1] %v1072
    %1094 = vst [vmem:[#allocation4 + $0x2] sm:$0x1] %v1080
    %1095 = vst [vmem:[#allocation4 + $0x3] sm:$0x1] %v1082
    %1096 = vst [vmem:[#allocation4 + $0x4] sm:$0x1] %v1065
    %1097 = vst [vmem:[#allocation4 + $0x5] sm:$0x1] %v1079
    %1098 = vst [vmem:[#allocation4 + $0x6] sm:$0x1] %v1081
    %1099 = vst [vmem:[#allocation4 + $0x7] sm:$0x1] %v1083
    // Predicated region
    $region34: #{ann2h1d_forward.1} parent=1 // pred_check
      _
    $region35: #{ann2h1d_forward.1} parent=1 // pred_check_branch
      %1101 = sbr.rel (0) target = $region37
    $region36: #{ann2h1d_forward.1} parent=1 // pred_region
      // Predicated region
      $region38: #{ann2h1d_forward.1} parent=36 // pred_check
        _
      $region39: #{ann2h1d_forward.1} parent=36 // pred_check_branch
        %1103 = sbr.rel (0) target = $region41
      $region40: #{ann2h1d_forward.1} parent=36 // pred_region
        // Predicated region
        $region42: #{ann2h1d_forward.1} parent=40 // pred_check
          _
        $region43: #{ann2h1d_forward.1} parent=40 // pred_check_branch
          %1105 = sbr.rel target = $region45
        $region44: #{ann2h1d_forward.1} parent=40 // pred_region
          // Predicated region
          $region57: #{ann2h1d_forward.1} parent=44 // pred_check
            _
          $region58: #{ann2h1d_forward.1} parent=44 // pred_check_branch
            %1121 = sbr.rel (0) target = $region60
          $region59: #{ann2h1d_forward.1} parent=44 // pred_region
            %s1123 = ssub.s32 2, 1
            loop: start=0, step=1, limit=1
            $region61: #{ann2h1d_forward.1} parent=59 // loop_pre_header
              _
            $region62: #{ann2h1d_forward.1} parent=59 // loop_header
              %s1125 = sphi 0, %s1129
              %p1126 = scmp.ge.s32.totalorder %s1125, 1
              %s1130 = sphi [#allocation4], [#allocation4]
              %s1131 = sphi %s7, %s7
            $region63: #{ann2h1d_forward.1} parent=59 // loop_header_branch
              %1128 = sbr.rel (%p1126) target = $region67
            $region64: #{ann2h1d_forward.1} parent=59 // loop_body
              %v1132 = vld [vmem:[%s1130] sm:%s1123]
              %1133 = vst [vmem:[%s1131] sm:%s1123] %v1132
            $region65: #{ann2h1d_forward.1} parent=59 // loop_footer
              %s1129 = sadd.s32 1, %s1125
            $region66: #{ann2h1d_forward.1} parent=59 // loop_footer_branch
              %1124 = sbr.rel target = $region62
            $region67: #{ann2h1d_forward.1} parent=59 // loop_exit
              _
          $region60: #{ann2h1d_forward.1} parent=44 // pred_fallthru
            _
        $region45: #{ann2h1d_forward.1} parent=40 // pred_fallthru
          _
        // Predicated region
        $region46: #{ann2h1d_forward.1} parent=40 // pred_check
          _
        $region47: #{ann2h1d_forward.1} parent=40 // pred_check_branch
          %1107 = sbr.rel (0) target = $region49
        $region48: #{ann2h1d_forward.1} parent=40 // pred_region
          %s1109 = ssub.s32 2, 1
          loop: start=0, step=1, limit=1
          $region50: #{ann2h1d_forward.1} parent=48 // loop_pre_header
            _
          $region51: #{ann2h1d_forward.1} parent=48 // loop_header
            %s1111 = sphi 0, %s1115
            %p1112 = scmp.ge.s32.totalorder %s1111, 1
            %s1116 = sphi [#allocation4], [#allocation4]
            %s1117 = sphi %s7, %s7
          $region52: #{ann2h1d_forward.1} parent=48 // loop_header_branch
            %1114 = sbr.rel (%p1112) target = $region56
          $region53: #{ann2h1d_forward.1} parent=48 // loop_body
            %v1118 = vld [vmem:[%s1116] sm:%s1109]
            %1119 = vst [vmem:[%s1117] sm:%s1109] %v1118
          $region54: #{ann2h1d_forward.1} parent=48 // loop_footer
            %s1115 = sadd.s32 1, %s1111
          $region55: #{ann2h1d_forward.1} parent=48 // loop_footer_branch
            %1110 = sbr.rel target = $region51
          $region56: #{ann2h1d_forward.1} parent=48 // loop_exit
            _
        $region49: #{ann2h1d_forward.1} parent=40 // pred_fallthru
          _
      $region41: #{ann2h1d_forward.1} parent=36 // pred_fallthru
        _
      %1134 = vnop
    $region37: #{ann2h1d_forward.1} parent=1 // pred_fallthru
      _
    // Predicated region
    $region68: #{ann2h1d_forward.1} parent=1 // pred_check
      _
    $region69: #{ann2h1d_forward.1} parent=1 // pred_check_branch
      %1136 = sbr.rel (0) target = $region71
    $region70: #{ann2h1d_forward.1} parent=1 // pred_region
      _
    $region71: #{ann2h1d_forward.1} parent=1 // pred_fallthru
      _
    %1137 = vsyncpa [#allocation3], 1

</llo_original>
